<compile_context>
chip_gen: v7x
topology: tpu7x:2x2x1
jax: 0.10.0
libtpu: 0.0.40
codegen_flags: <defaults>
</compile_context>

<pallas_src>
import math

import jax
import jax.numpy as jnp
from jax.experimental import pallas as pl
from jax.experimental.pallas import tpu as pltpu

# ---- hyperparameters implied by the module's __init__ / forward ----
NUM_CLASSES = 2
INPUT_SIZE = 32
HIDDEN_N = 32
N_LAYERS = 2
OUTPUT_NET_SIZE = 1 if NUM_CLASSES == 2 else NUM_CLASSES

LANE = 128
MAX_TILE_B = 16384            # batch rows per grid step; sweep 8192/16384/32768
VMEM_LIMIT_BYTES = 32 * 1024 * 1024  # explicit raise for v5e's 16 MiB default


def _cdiv(a, b):
    return -(-a // b)


def _round_up(n, m):
    return ((n + m - 1) // m) * m


def _choose_batch_tiling(batch, max_tile_b):
    """Pick (tile_b, num_tiles, batch_padded) with minimal padding.

    Pads only to a multiple of 128 (plus the small remainder needed for the
    grid to divide evenly): waste is bounded by ~128*num_tiles rows, <1% of a
    large batch, instead of up to a whole tile.
    """
    b128 = _round_up(max(batch, 1), LANE)
    num_tiles = _cdiv(b128, max_tile_b)
    # Let v7x's two TensorCores both work when there is enough batch for each
    # core to get a well-amortized tile (harmless extra step on v5e/v6e).
    if num_tiles == 1 and b128 >= 2 * 8 * LANE:
        num_tiles = 2
    if num_tiles > 1 and num_tiles % 2:
        num_tiles += 1  # even split across the two cores
    tile_b = _round_up(_cdiv(b128, num_tiles), LANE)
    return tile_b, num_tiles, tile_b * num_tiles


def make_binary_net_kernel(n_layers):
    """Whole forward pass on one (TILE_B, INPUT_SIZE) native-layout x tile."""

    def kernel(*refs):
        x_ref = refs[0]                    # (TILE_B, INPUT_SIZE) f32, native layout
        w_refs = refs[1:1 + n_layers]      # each (out_f, in_f) f32, already +/-1
        out_ref = refs[1 + n_layers]       # (out_f_last, TILE_B) f32

        x = x_ref[...]
        h = None
        for li, w_ref in enumerate(w_refs):
            w = w_ref[...]
            if li == 0:
                # Layer 1 also performs the layout flip: contracting on both
                # operands' last dims (W @ x^T) feeds the MXU straight from the
                # contiguous (TILE_B, 32) tile -- no materialized transpose --
                # and leaves activations (features, batch) == lane-dense.
                z = jax.lax.dot_general(
                    w, x,
                    dimension_numbers=(((1,), (1,)), ((), ())),
                    preferred_element_type=jnp.float32)          # (out_f, TILE_B)
            elif w.shape[0] == 1:
                # M=1 matmul is the worst MXU shape (one result sublane per
                # push); use VPU broadcast-mul + XLU sublane reduce instead,
                # which sit on otherwise-idle slots.
                z = jnp.sum(w.T * h, axis=0, keepdims=True)      # (1, TILE_B)
            else:
                z = jnp.dot(w, h, preferred_element_type=jnp.float32)
            # BinaryTanh for num_classes == 2:
            #   hardtanh (sign-preserving) -> binarize -> (s+1)/2 => {0, 1}
            # TODO(synk): this {0,1} mapping is the num_classes==2 variant only;
            # multi-class BinaryTanh would need +/-1 activations instead.
            h = jnp.where(z >= 0.0, 1.0, 0.0)
        out_ref[...] = h

    return kernel


def binary_net_forward(x, weights):
    """x: any shape flattening to (-1, INPUT_SIZE); weights: list of (out, in) f32."""
    x2d = x.reshape(-1, INPUT_SIZE).astype(jnp.float32)
    batch = x2d.shape[0]

    # Binarize the weights once (BinarizeF: w >= 0 -> +1, w < 0 -> -1), wrapper
    # side, so it is never recomputed per grid step.  PyTorch (out, in) layout
    # is exactly what the kernel's matmuls need -- no transpose anywhere.
    bws = [jnp.where(w >= 0.0, 1.0, -1.0).astype(jnp.float32) for w in weights]
    out_features = int(bws[-1].shape[0])

    tile_b, num_tiles, batch_padded = _choose_batch_tiling(batch, MAX_TILE_B)
    if batch_padded != batch:
        # Only the <=128*num_tiles remainder rows are padded (one extra HBM
        # pass, bounded by ~1% of x for large batches).  Padded rows produce
        # garbage output columns which are sliced off below.
        x2d = jnp.pad(x2d, ((0, batch_padded - batch), (0, 0)))

    kernel = make_binary_net_kernel(len(bws))

    flops = 2 * batch_padded * sum(int(w.shape[0]) * int(w.shape[1]) for w in bws)
    bytes_accessed = int(
        batch_padded * INPUT_SIZE * 4
        + sum(int(w.size) for w in bws) * 4
        + out_features * batch_padded * 4
    )

    out_padded = pl.pallas_call(
        kernel,
        out_shape=jax.ShapeDtypeStruct((out_features, batch_padded), jnp.float32),
        grid=(num_tiles,),
        in_specs=[pl.BlockSpec((tile_b, INPUT_SIZE), lambda i: (i, 0))]
        + [pl.BlockSpec(w.shape, lambda i: (0, 0)) for w in bws],
        out_specs=pl.BlockSpec((out_features, tile_b), lambda i: (0, i)),
        compiler_params=pltpu.CompilerParams(
            dimension_semantics=("parallel",),
            vmem_limit_bytes=VMEM_LIMIT_BYTES,
        ),
        cost_estimate=pl.CostEstimate(
            flops=flops, transcendentals=0, bytes_accessed=bytes_accessed
        ),
    )(x2d, *bws)

    out = out_padded[:, :batch]  # drop padded batch columns (garbage, discarded)
    if NUM_CLASSES == 2:
        # final BinaryTanh does .squeeze(): (batch, 1) -> (batch,)
        return jnp.squeeze(out)
    return out.T


def init_weights(key):
    """Deterministic init mirroring BinaryLinear.reset_parameters (uniform(-stdv, stdv))."""
    weights = []
    in_f = INPUT_SIZE
    out_f = HIDDEN_N
    for i in range(N_LAYERS):
        if i == N_LAYERS - 1:
            out_f = OUTPUT_NET_SIZE
        key, sub = jax.random.split(key)
        stdv = math.sqrt(1.5 / (in_f + out_f))
        w = jax.random.uniform(
            sub, (out_f, in_f), dtype=jnp.float32, minval=-stdv, maxval=stdv
        )
        weights.append(w)
        in_f = HIDDEN_N
    return weights


def reference_forward(x, weights):
    """Pure-JAX reference of the PyTorch forward, for a sanity check."""
    h = x.reshape(-1, INPUT_SIZE).astype(jnp.float32)
    for w in weights:
        bw = jnp.where(w >= 0.0, 1.0, -1.0)
        z = h @ bw.T
        h = jnp.where(z >= 0.0, 1.0, 0.0)
    return jnp.squeeze(h)


if __name__ == "__main__":
    key = jax.random.PRNGKey(0)
    k_x, k_w = jax.random.split(key)

    weights = init_weights(k_w)

    # --- small test (mirrors the module at tiny shapes) ---
    # Integer-valued inputs keep every matmul exactly representable so the
    # kernel/reference comparison is bit-exact regardless of MXU accumulation
    # order (real-valued data would only risk flipping bits for z ~= 0).
    batch = 8
    x = jax.random.randint(k_x, (batch, INPUT_SIZE), minval=-3, maxval=4).astype(
        jnp.float32
    )
    out = jax.block_until_ready(binary_net_forward(x, weights))
    ref = reference_forward(x, weights)
    assert out.shape == (batch,), out.shape
    assert bool(jnp.all(out == ref)), "mismatch vs. pure-JAX reference (small batch)"

    # --- multi-tile test: exercises the batch grid + ragged-tail padding ---
    k_x2 = jax.random.fold_in(k_x, 1)
    batch2 = 3000  # -> padded to 3072, grid of 2 tiles of 1536
    x2 = jax.random.randint(
        k_x2, (batch2, INPUT_SIZE), minval=-3, maxval=4
    ).astype(jnp.float32)
    out2 = jax.block_until_ready(binary_net_forward(x2, weights))
    ref2 = reference_forward(x2, weights)
    assert out2.shape == (batch2,), out2.shape
    assert bool(jnp.all(out2 == ref2)), "mismatch vs. pure-JAX reference (multi-tile)"

    print("KERNEL_OK")
</pallas_src>

<mosaic_0001>
module attributes {stable_mosaic.version = 11 : i64} {
  func.func @kernel(%arg0: i32, %arg1: memref<128x32xf32, #tpu.memory_space<vmem>>, %arg2: memref<32x32xf32, #tpu.memory_space<vmem>>, %arg3: memref<1x32xf32, #tpu.memory_space<vmem>>, %arg4: memref<1x128xf32, #tpu.memory_space<vmem>>) attributes {dimension_semantics = [#tpu.dimension_semantics<parallel>], iteration_bounds = array<i64: 1>, scalar_prefetch = 0 : i64, scratch_operands = 0 : i64, tpu.core_type = #tpu.core_type<tc>, window_params = [{transform_indices = @transform_0, window_bounds = array<i64: 128, 32>}, {pipeline_mode = #tpu.pipeline_mode<synchronous>, transform_indices = @transform_1, window_bounds = array<i64: 32, 32>}, {pipeline_mode = #tpu.pipeline_mode<synchronous>, transform_indices = @transform_2, window_bounds = array<i64: 1, 32>}, {transform_indices = @transform_3, window_bounds = array<i64: 1, 128>}]} {
    %c0 = arith.constant 0 : index
    %c0_0 = arith.constant 0 : index
    %0 = vector.load %arg1[%c0, %c0_0] : memref<128x32xf32, #tpu.memory_space<vmem>>, vector<128x32xf32>
    %c0_1 = arith.constant 0 : index
    %c0_2 = arith.constant 0 : index
    %1 = vector.load %arg2[%c0_1, %c0_2] : memref<32x32xf32, #tpu.memory_space<vmem>>, vector<32x32xf32>
    %cst = arith.constant dense<0.000000e+00> : vector<32x128xf32>
    %2 = tpu.matmul %1, %0, %cst {dimension_numbers = #tpu.dot_dimension_numbers<[1], [1], [0], [0], [0, 0, 1, 0], [], []>} : vector<32x32xf32>, vector<128x32xf32>, vector<32x128xf32> -> vector<32x128xf32>
    %cst_3 = arith.constant 0.000000e+00 : f32
    %3 = vector.broadcast %cst_3 : f32 to vector<32x128xf32>
    %4 = arith.cmpf oge, %2, %3 : vector<32x128xf32>
    %cst_4 = arith.constant 1.000000e+00 : f32
    %cst_5 = arith.constant 0.000000e+00 : f32
    %5 = vector.broadcast %cst_4 : f32 to vector<32x128xf32>
    %6 = vector.broadcast %cst_5 : f32 to vector<32x128xf32>
    %7 = arith.select %4, %5, %6 : vector<32x128xi1>, vector<32x128xf32>
    %c0_6 = arith.constant 0 : index
    %c0_7 = arith.constant 0 : index
    %8 = vector.load %arg3[%c0_6, %c0_7] : memref<1x32xf32, #tpu.memory_space<vmem>>, vector<1x32xf32>
    %9 = tpu.transpose %8, [1, 0] : vector<1x32xf32> -> vector<32x1xf32>
    %10 = vector.broadcast %9 : vector<32x1xf32> to vector<32x128xf32>
    %11 = arith.mulf %10, %7 : vector<32x128xf32>
    %cst_8 = arith.constant dense<0.000000e+00> : vector<128xf32>
    %12 = vector.multi_reduction <add>, %11, %cst_8 [0] : vector<32x128xf32> to vector<128xf32>
    %13 = vector.shape_cast %12 : vector<128xf32> to vector<1x128xf32>
    %cst_9 = arith.constant 0.000000e+00 : f32
    %14 = vector.broadcast %cst_9 : f32 to vector<1x128xf32>
    %15 = arith.cmpf oge, %13, %14 : vector<1x128xf32>
    %cst_10 = arith.constant 1.000000e+00 : f32
    %cst_11 = arith.constant 0.000000e+00 : f32
    %16 = vector.broadcast %cst_10 : f32 to vector<1x128xf32>
    %17 = vector.broadcast %cst_11 : f32 to vector<1x128xf32>
    %18 = arith.select %15, %16, %17 : vector<1x128xi1>, vector<1x128xf32>
    %c0_12 = arith.constant 0 : index
    %c0_13 = arith.constant 0 : index
    %19 = vector.load %arg4[%c0_12, %c0_13] : memref<1x128xf32, #tpu.memory_space<vmem>>, vector<1x128xf32>
    tpu.vector_store %arg4[%c0_12, %c0_13], %18 {strides = array<i32>} : memref<1x128xf32, #tpu.memory_space<vmem>>, vector<1x128xf32>,
    return
  }
  func.func @transform_0(%arg0: i32) -> (i32, i32) {
    %c0_i32 = arith.constant 0 : i32
    %c0_i32_0 = arith.constant 0 : i32
    return %arg0, %c0_i32 : i32, i32
  }
  func.func @transform_1(%arg0: i32) -> (i32, i32) {
    %c0_i32 = arith.constant 0 : i32
    %c0_i32_0 = arith.constant 0 : i32
    %c0_i32_1 = arith.constant 0 : i32
    return %c0_i32, %c0_i32_0 : i32, i32
  }
  func.func @transform_2(%arg0: i32) -> (i32, i32) {
    %c0_i32 = arith.constant 0 : i32
    %c0_i32_0 = arith.constant 0 : i32
    %c0_i32_1 = arith.constant 0 : i32
    return %c0_i32, %c0_i32_0 : i32, i32
  }
  func.func @transform_3(%arg0: i32) -> (i32, i32) {
    %c0_i32 = arith.constant 0 : i32
    %c0_i32_0 = arith.constant 0 : i32
    return %c0_i32, %arg0 : i32, i32
  }
}

</mosaic_0001>

<llo_original>
// kernel: tpu_custom_call.1
$region0: #{tpu_custom_call.1}
  #allocation0 [shape = 'u32[]', space=smem, size = 0x4, offset = 0x4, fixed_abs, tag = 'smem constant byte address 0x4 - core index']
  #allocation1 [shape = 'u32[144,128]{1,0:T(1,128)}', space=vmem, size = 0x12000, scoped, tag = 'internal scratch']
  %s0 = inlined_call_operand.vmem [shape: f32[128,32], index: 0, kind: input, shape index: {}]
  %s1 = inlined_call_operand.vmem [shape: f32[32,32], index: 1, kind: input, shape index: {}]
  %s2 = inlined_call_operand.vmem [shape: f32[1,32], index: 2, kind: input, shape index: {}]
  %s3 = inlined_call_operand.hbm [shape: f32[1,128], index: 3, kind: output, shape index: {}]
  %s4 = sld [smem:[#allocation0]]
  $region22: #{tpu_custom_call.1} parent=0
    _
  %s6 = ssub.s32 1, %s4
  %s7 = scalar_select 0, %s6, %s4
  $region1: #{tpu_custom_call.1} parent=0
    #allocation2 [shape = 'u8[512]{0}', space=vmem, size = 0x400, scoped, tag = 'output window, operand 0, single buffered']
    #allocation3 [shape = 's32[1]{0}', space=sflag, size = 0x4, scoped, tag = 'scoped memory for tpu_custom_call.1']
    %8 = vsyncpa [#allocation3], 0
    // Predicated region
    $region2: #{tpu_custom_call.1} parent=1 // pred_check
      _
    $region3: #{tpu_custom_call.1} parent=1 // pred_check_branch
      %10 = sbr.rel (0) target = $region5
    $region4: #{tpu_custom_call.1} parent=1 // pred_region
      _
    $region5: #{tpu_custom_call.1} parent=1 // pred_fallthru
      _
    // Predicated region
    $region6: #{tpu_custom_call.1} parent=1 // pred_check
      _
    $region7: #{tpu_custom_call.1} parent=1 // pred_check_branch
      %12 = sbr.rel (0) target = $region9
    $region8: #{tpu_custom_call.1} parent=1 // pred_region
      _
    $region9: #{tpu_custom_call.1} parent=1 // pred_fallthru
      _
    // Predicated region
    $region10: #{tpu_custom_call.1} parent=1 // pred_check
      _
    $region11: #{tpu_custom_call.1} parent=1 // pred_check_branch
      %14 = sbr.rel (0) target = $region13
    $region12: #{tpu_custom_call.1} parent=1 // pred_region
      _
    $region13: #{tpu_custom_call.1} parent=1 // pred_fallthru
      _
    %v15 = vld [vmem:[%s0] sm:$0xff]
    %v16 = vld [vmem:[%s0 + $0x8] sm:$0xff]
    %v17 = vld [vmem:[%s0 + $0x10] sm:$0xff]
    %v18 = vld [vmem:[%s0 + $0x18] sm:$0xff]
    %v19 = vld [vmem:[%s0 + $0x20] sm:$0xff]
    %v20 = vld [vmem:[%s0 + $0x28] sm:$0xff]
    %v21 = vld [vmem:[%s0 + $0x30] sm:$0xff]
    %v22 = vld [vmem:[%s0 + $0x38] sm:$0xff]
    %v23 = vld [vmem:[%s0 + $0x40] sm:$0xff]
    %v24 = vld [vmem:[%s0 + $0x48] sm:$0xff]
    %v25 = vld [vmem:[%s0 + $0x50] sm:$0xff]
    %v26 = vld [vmem:[%s0 + $0x58] sm:$0xff]
    %v27 = vld [vmem:[%s0 + $0x60] sm:$0xff]
    %v28 = vld [vmem:[%s0 + $0x68] sm:$0xff]
    %v29 = vld [vmem:[%s0 + $0x70] sm:$0xff]
    %v30 = vld [vmem:[%s0 + $0x78] sm:$0xff]
    %v31 = vld [vmem:[%s1] sm:$0xff]
    %v32 = vld [vmem:[%s1 + $0x8] sm:$0xff]
    %v33 = vld [vmem:[%s1 + $0x10] sm:$0xff]
    %v34 = vld [vmem:[%s1 + $0x18] sm:$0xff]
    %vm35 = vcmask 261120
    %v37 = vsel %vm35, %v31, 0
    %v40 = vsel %vm35, %v32, 0
    %v43 = vsel %vm35, %v33, 0
    %v46 = vsel %vm35, %v34, 0
    %v49 = vsel %vm35, %v15, 0
    %v52 = vsel %vm35, %v16, 0
    %v55 = vsel %vm35, %v17, 0
    %v58 = vsel %vm35, %v18, 0
    %v61 = vsel %vm35, %v19, 0
    %v64 = vsel %vm35, %v20, 0
    %v67 = vsel %vm35, %v21, 0
    %v70 = vsel %vm35, %v22, 0
    %v73 = vsel %vm35, %v23, 0
    %v76 = vsel %vm35, %v24, 0
    %v79 = vsel %vm35, %v25, 0
    %v82 = vsel %vm35, %v26, 0
    %v85 = vsel %vm35, %v27, 0
    %v88 = vsel %vm35, %v28, 0
    %v91 = vsel %vm35, %v29, 0
    %v94 = vsel %vm35, %v30, 0
    %96 = vmatprep.subr.mxu0 0.0
    %97 = vmatpush1.xpose.msra.mxu0 %v49
    %98 = vmatprep.subr.mxu0 0.0
    %99 = vmatpush1.xpose.msra.mxu0 %v52
    %100 = vmatprep.subr.mxu0 0.0
    %101 = vmatpush1.xpose.msra.mxu0 %v55
    %102 = vmatprep.subr.mxu0 0.0
    %103 = vmatpush1.xpose.msra.mxu0 %v58
    %104 = vmatprep.subr.mxu0 0.0
    %105 = vmatpush1.xpose.msra.mxu0 %v61
    %106 = vmatprep.subr.mxu0 0.0
    %107 = vmatpush1.xpose.msra.mxu0 %v64
    %108 = vmatprep.subr.mxu0 0.0
    %109 = vmatpush1.xpose.msra.mxu0 %v67
    %110 = vmatprep.subr.mxu0 0.0
    %111 = vmatpush1.xpose.msra.mxu0 %v70
    %112 = vmatprep.subr.mxu0 0.0
    %113 = vmatpush1.xpose.msra.mxu0 %v73
    %114 = vmatprep.subr.mxu0 0.0
    %115 = vmatpush1.xpose.msra.mxu0 %v76
    %116 = vmatprep.subr.mxu0 0.0
    %117 = vmatpush1.xpose.msra.mxu0 %v79
    %118 = vmatprep.subr.mxu0 0.0
    %119 = vmatpush1.xpose.msra.mxu0 %v82
    %120 = vmatprep.subr.mxu0 0.0
    %121 = vmatpush1.xpose.msra.mxu0 %v85
    %122 = vmatprep.subr.mxu0 0.0
    %123 = vmatpush1.xpose.msra.mxu0 %v88
    %124 = vmatprep.subr.mxu0 0.0
    %125 = vmatpush1.xpose.msra.mxu0 %v91
    %126 = vmatprep.subr.mxu0 0.0
    %127 = vmatpush1.xpose.msra.mxu0 %v94
    %128 = vmatprep.subr.mxu0 0.0
    %129 = vmatpush1.xpose.msra.mxu0 0.0
    %130 = vmatprep.subr.mxu0 0.0
    %131 = vmatpush1.xpose.msra.mxu0 0.0
    %132 = vmatprep.subr.mxu0 0.0
    %133 = vmatpush1.xpose.msra.mxu0 0.0
    %134 = vmatprep.subr.mxu0 0.0
    %135 = vmatpush1.xpose.msra.mxu0 0.0
    %136 = vmatprep.subr.mxu0 0.0
    %137 = vmatpush1.xpose.msra.mxu0 0.0
    %138 = vmatprep.subr.mxu0 0.0
    %139 = vmatpush1.xpose.msra.mxu0 0.0
    %140 = vmatprep.subr.mxu0 0.0
    %141 = vmatpush1.xpose.msra.mxu0 0.0
    %142 = vmatprep.subr.mxu0 0.0
    %143 = vmatpush1.xpose.msra.mxu0 0.0
    %144 = vmatprep.subr.mxu0 0.0
    %145 = vmatpush1.xpose.msra.mxu0 0.0
    %146 = vmatprep.subr.mxu0 0.0
    %147 = vmatpush1.xpose.msra.mxu0 0.0
    %148 = vmatprep.subr.mxu0 0.0
    %149 = vmatpush1.xpose.msra.mxu0 0.0
    %150 = vmatprep.subr.mxu0 0.0
    %151 = vmatpush1.xpose.msra.mxu0 0.0
    %152 = vmatprep.subr.mxu0 0.0
    %153 = vmatpush1.xpose.msra.mxu0 0.0
    %154 = vmatprep.subr.mxu0 0.0
    %155 = vmatpush1.xpose.msra.mxu0 0.0
    %156 = vmatprep.subr.mxu0 0.0
    %157 = vmatpush1.xpose.msra.mxu0 0.0
    %158 = vmatprep.subr.mxu0 0.0
    %159 = vmatpush1.xpose.msra.mxu0 0.0
    %160 = vmatprep.mubr.f32.mxu0 0.0
    %161 = vmatmul.mubr.f32.gmra.mrb[0].mxu0 %v37
    %v162 = vpop.f32.mrb[0].mxu0
    %v163 = vadd.f32 0.0, %v162
    %v164 = vpop.f32.mrb[0].mxu0
    %165 = vmatprep.mubr.f32.mxu0 0.0
    %166 = vmatmul.mubr.f32.gmra.mrb[0].mxu0 %v40
    %v167 = vpop.f32.mrb[0].mxu0
    %v168 = vadd.f32 0.0, %v167
    %v169 = vpop.f32.mrb[0].mxu0
    %170 = vmatprep.mubr.f32.mxu0 0.0
    %171 = vmatmul.mubr.f32.gmra.mrb[0].mxu0 %v43
    %v172 = vpop.f32.mrb[0].mxu0
    %v173 = vadd.f32 0.0, %v172
    %v174 = vpop.f32.mrb[0].mxu0
    %175 = vmatprep.mubr.f32.mxu0 0.0
    %176 = vmatmul.mubr.f32.gmra.mrb[0].mxu0 %v46
    %v177 = vpop.f32.mrb[0].mxu0
    %v178 = vadd.f32 0.0, %v177
    %v179 = vpop.f32.mrb[0].mxu0
    %180 = vdwg.mxu0
    %vm181 = vcmp.ge.f32.partialorder %v163, 0.0
    %vm182 = vcmp.ge.f32.partialorder %v168, 0.0
    %vm183 = vcmp.ge.f32.partialorder %v173, 0.0
    %vm184 = vcmp.ge.f32.partialorder %v178, 0.0
    %v185 = vsel %vm181, 1.0, 0.0
    %v186 = vsel %vm182, 1.0, 0.0
    %v187 = vsel %vm183, 1.0, 0.0
    %v188 = vsel %vm184, 1.0, 0.0
    %v189 = vld [vmem:[%s2] sm:$0x1]
    %190 = vxpose.xlu0.b32.start [1/16] %v189, 128
    %191 = vxpose.xlu0.b32.cont [2/16] 0.0, 128
    %192 = vxpose.xlu0.b32.cont [3/16] 0.0, 128
    %193 = vxpose.xlu0.b32.cont [4/16] 0.0, 128
    %194 = vxpose.xlu0.b32.cont [5/16] 0.0, 128
    %195 = vxpose.xlu0.b32.cont [6/16] 0.0, 128
    %196 = vxpose.xlu0.b32.cont [7/16] 0.0, 128
    %197 = vxpose.xlu0.b32.cont [8/16] 0.0, 128
    %198 = vxpose.xlu0.b32.cont [9/16] 0.0, 128
    %199 = vxpose.xlu0.b32.cont [10/16] 0.0, 128
    %200 = vxpose.xlu0.b32.cont [11/16] 0.0, 128
    %201 = vxpose.xlu0.b32.cont [12/16] 0.0, 128
    %202 = vxpose.xlu0.b32.cont [13/16] 0.0, 128
    %203 = vxpose.xlu0.b32.cont [14/16] 0.0, 128
    %204 = vxpose.xlu0.b32.cont [15/16] 0.0, 128
    %205 = vxpose.xlu0.b32.end [16/16] 0.0, 128
    %v206 = vpop.trf.xlu0
    %v207 = vpop.trf.xlu0
    %v208 = vpop.trf.xlu0
    %v209 = vpop.trf.xlu0
    %v210 = vpop.trf.xlu0
    %v211 = vpop.trf.xlu0
    %v212 = vpop.trf.xlu0
    %v213 = vpop.trf.xlu0
    %v214 = vpop.trf.xlu0
    %v215 = vpop.trf.xlu0
    %v216 = vpop.trf.xlu0
    %v217 = vpop.trf.xlu0
    %v218 = vpop.trf.xlu0
    %v219 = vpop.trf.xlu0
    %v220 = vpop.trf.xlu0
    %v221 = vpop.trf.xlu0
    %223 = vset.pattern.permute.xlu0 0
    %224 = vperm.xlu0 %223, %v206
    %v225 = vpop.permute.xlu0 %224
    %228 = vset.pattern.permute.xlu0 0
    %229 = vperm.xlu0 %228, %v207
    %v230 = vpop.permute.xlu0 %229
    %233 = vset.pattern.permute.xlu0 0
    %234 = vperm.xlu0 %233, %v208
    %v235 = vpop.permute.xlu0 %234
    %238 = vset.pattern.permute.xlu0 0
    %239 = vperm.xlu0 %238, %v209
    %v240 = vpop.permute.xlu0 %239
    %v242 = vmul.f32 %v225, %v185
    %v243 = vmul.f32 %v230, %v186
    %v244 = vmul.f32 %v235, %v187
    %v245 = vmul.f32 %v240, %v188
    %v246 = vadd.f32 %v242, %v243
    %v247 = vadd.f32 %v246, %v244
    %v248 = vadd.f32 %v247, %v245
    %v249 = vrot.slane %v248, 4
    %v250 = vadd.f32 %v248, %v249
    %v251 = vrot.slane %v250, 2
    %v252 = vadd.f32 %v250, %v251
    %v253 = vrot.slane %v252, 1
    %v254 = vadd.f32 %v252, %v253
    %vm255 = vcmp.ge.f32.partialorder %v254, 0.0
    %v256 = vsel %vm255, 1.0, 0.0
    %257 = vst [vmem:[#allocation2] sm:$0x1] %v256
    // Predicated region
    $region14: #{tpu_custom_call.1} parent=1 // pred_check
      _
    $region15: #{tpu_custom_call.1} parent=1 // pred_check_branch
      %259 = sbr.rel (0) target = $region17
    $region16: #{tpu_custom_call.1} parent=1 // pred_region
      %s261 = ssub.s32 16, 16
      %262 = vsyncadd [#allocation3], %s261
      %s264 = sshll.u32 [#allocation2], 4
      %s265 = int_to_ptr.vmem [resolvable:$true] %s264
      %267 = dma.vmem_to_hbm [thread:$0]  %s265, 16, %s3, [#allocation3]
    $region17: #{tpu_custom_call.1} parent=1 // pred_fallthru
      _
    // Predicated region
    $region18: #{tpu_custom_call.1} parent=1 // pred_check
      _
    $region19: #{tpu_custom_call.1} parent=1 // pred_check_branch
      %269 = sbr.rel (0) target = $region21
    $region20: #{tpu_custom_call.1} parent=1 // pred_region
      %270 = dma.done [#allocation3], 16
    $region21: #{tpu_custom_call.1} parent=1 // pred_fallthru
      _
    %271 = vsyncpa [#allocation3], 1

</llo_original>
